<compile_context>
chip_gen: v7x
topology: tpu7x:2x2x1
jax: 0.10.0
libtpu: 0.0.40
codegen_flags: <defaults>
</compile_context>

<pallas_src>
import functools

import jax
import jax.numpy as jnp
from jax.experimental import pallas as pl
from jax.experimental.pallas import tpu as pltpu

_LN_EPS = 1e-5


# ----------------------------------------------------------------------------
# helpers
# ----------------------------------------------------------------------------
def _round_up(x, n):
    return ((x + n - 1) // n) * n


def _pick_tile(dim, desired, align=128):
    """Largest multiple of `align` that divides `dim` and is <= desired."""
    assert dim % align == 0, f"dim {dim} must be a multiple of {align}"
    best = align
    t = align
    while t <= min(desired, dim):
        if dim % t == 0:
            best = t
        t += align
    return best


def _pick_block_m(m, hint):
    """Sublane-aligned M tile; keep >=2 parallel blocks (v7x has 2 TensorCores)."""
    bm = min(hint, _round_up(m, 8))
    if pl.cdiv(m, bm) < 2 and m > 8:
        bm = max(8, _round_up(pl.cdiv(m, 2), 8))
    return bm


def _vmem_capacity_bytes():
    """Per-core VMEM capacity (64 MiB on v7x, 128 MiB on v5e/v6e)."""
    try:
        return int(getattr(pltpu.get_tpu_info(), "vmem_capacity_bytes", 64 << 20))
    except Exception:
        return 64 << 20


def _vmem_limit_bytes(step_bytes):
    cap = _vmem_capacity_bytes()
    want = 2 * int(step_bytes) + (8 << 20)          # double-buffered tiles + headroom
    lo = min(32 << 20, cap)
    hi = max(lo, cap - (16 << 20))                  # leave compiler scratch headroom
    return int(min(max(want, lo), hi))


# ----------------------------------------------------------------------------
# Fused LayerNorm + Linear:  out = LN(x) @ W + b
# Grid (M blocks [parallel], N blocks [arbitrary]); the x tile stays resident
# across N and its LayerNorm is cached in an f32 VMEM scratch at j == 0.
# ----------------------------------------------------------------------------
def _ln_linear_kernel(x_ref, g_ref, b_ref, w_ref, bias_ref, o_ref, nx_ref):
    j = pl.program_id(1)

    @pl.when(j == 0)
    def _():
        xx = x_ref[...].astype(jnp.float32)
        mu = jnp.mean(xx, axis=-1, keepdims=True)
        var = jnp.mean(jnp.square(xx - mu), axis=-1, keepdims=True)
        nx_ref[...] = (xx - mu) * jax.lax.rsqrt(var + _LN_EPS) * g_ref[...] + b_ref[...]

    o_ref[...] = (jnp.dot(nx_ref[...].astype(w_ref.dtype), w_ref[...],
                          preferred_element_type=jnp.float32)
                  + bias_ref[...]).astype(o_ref.dtype)


def ln_linear_pallas(x2d, gamma, beta, w, bias, *, bm_hint=512, bn_hint=512):
    m, emb = x2d.shape
    n = w.shape[1]
    assert emb % 128 == 0 and n % 128 == 0, "dims must be lane-aligned (x128)"
    bm = _pick_block_m(m, bm_hint)
    bn = _pick_tile(n, bn_hint)
    itemsize = x2d.dtype.itemsize
    step_bytes = (bm * emb + 2 * emb + emb * bn + bn + bm * bn) * itemsize + bm * emb * 4
    flops = int(2 * m * emb * n)
    bytes_accessed = int((x2d.size + gamma.size + beta.size + w.size + bias.size
                          + m * n) * itemsize)
    grid = (pl.cdiv(m, bm), n // bn)
    return pl.pallas_call(
        _ln_linear_kernel,
        out_shape=jax.ShapeDtypeStruct((m, n), x2d.dtype),
        grid_spec=pltpu.PrefetchScalarGridSpec(
            num_scalar_prefetch=0,
            grid=grid,
            in_specs=[
                pl.BlockSpec((bm, emb), lambda i, j: (i, 0)),   # x (resident over j)
                pl.BlockSpec((1, emb), lambda i, j: (0, 0)),    # LN gamma
                pl.BlockSpec((1, emb), lambda i, j: (0, 0)),    # LN beta
                pl.BlockSpec((emb, bn), lambda i, j: (0, j)),   # W column block
                pl.BlockSpec((1, bn), lambda i, j: (0, j)),     # bias column block
            ],
            out_specs=pl.BlockSpec((bm, bn), lambda i, j: (i, j)),
            scratch_shapes=[pltpu.VMEM((bm, emb), jnp.float32)],   # cached LN(x)
        ),
        compiler_params=pltpu.CompilerParams(
            # j must run sequentially so the j==0 LN scratch stays valid for the
            # rest of the row; megacore parallelism comes from the i axis.
            dimension_semantics=("parallel", "arbitrary"),
            vmem_limit_bytes=_vmem_limit_bytes(step_bytes)),
        cost_estimate=pl.CostEstimate(flops=flops, transcendentals=0,
                                      bytes_accessed=bytes_accessed),
    )(x2d, gamma.reshape(1, emb), beta.reshape(1, emb), w, bias.reshape(1, n))


# ----------------------------------------------------------------------------
# Linear with fused residual:  out = x @ W + b + residual
# ----------------------------------------------------------------------------
def _linear_residual_kernel(x_ref, w_ref, bias_ref, res_ref, o_ref):
    o_ref[...] = (jnp.dot(x_ref[...], w_ref[...], preferred_element_type=jnp.float32)
                  + bias_ref[...] + res_ref[...].astype(jnp.float32)
                  ).astype(o_ref.dtype)


def linear_residual_pallas(x2d, w, bias, residual2d, *, bm_hint=512, bn_hint=512):
    m, kdim = x2d.shape
    n = w.shape[1]
    assert kdim % 128 == 0 and n % 128 == 0
    bm = _pick_block_m(m, bm_hint)
    bn = _pick_tile(n, bn_hint)
    itemsize = x2d.dtype.itemsize
    step_bytes = (bm * kdim + kdim * bn + bn + 2 * bm * bn) * itemsize
    flops = int(2 * m * kdim * n)
    bytes_accessed = int((x2d.size + w.size + bias.size + residual2d.size + m * n)
                         * itemsize)
    grid = (pl.cdiv(m, bm), n // bn)
    return pl.pallas_call(
        _linear_residual_kernel,
        out_shape=jax.ShapeDtypeStruct((m, n), x2d.dtype),
        grid_spec=pltpu.PrefetchScalarGridSpec(
            num_scalar_prefetch=0,
            grid=grid,
            in_specs=[
                pl.BlockSpec((bm, kdim), lambda i, j: (i, 0)),
                pl.BlockSpec((kdim, bn), lambda i, j: (0, j)),
                pl.BlockSpec((1, bn), lambda i, j: (0, j)),
                pl.BlockSpec((bm, bn), lambda i, j: (i, j)),    # residual
            ],
            out_specs=pl.BlockSpec((bm, bn), lambda i, j: (i, j)),
        ),
        compiler_params=pltpu.CompilerParams(
            dimension_semantics=("parallel", "parallel"),
            vmem_limit_bytes=_vmem_limit_bytes(step_bytes)),
        cost_estimate=pl.CostEstimate(flops=flops, transcendentals=0,
                                      bytes_accessed=bytes_accessed),
    )(x2d, w, bias.reshape(1, n), residual2d)


# ----------------------------------------------------------------------------
# Fused masked multi-head attention: one batch per program, all heads per
# program (lane-dense E-wide context store in head-concat layout).
# ----------------------------------------------------------------------------
def _attn_kernel(qkv_ref, mask_ref, o_ref, *, num_heads, scale):
    E = o_ref.shape[-1]
    D = E // num_heads
    qkv = qkv_ref[0]                       # (S, 3E) = [Q_heads | K_heads | V_heads]
    msk = mask_ref[0]                      # (1, S) key-padding mask
    ctx = []
    for h in range(num_heads):             # static unroll over heads
        q = qkv[:, h * D:(h + 1) * D]
        k = qkv[:, E + h * D:E + (h + 1) * D]
        v = qkv[:, 2 * E + h * D:2 * E + (h + 1) * D]
        # q @ k^T contracting on D -- no explicit transpose, no f32 upcast.
        s = jax.lax.dot_general(q, k, (((1,), (1,)), ((), ())),
                                preferred_element_type=jnp.float32) * scale
        s = jnp.where(msk == 0.0, -1e9, s)            # mask keys (broadcast rows)
        s = s - jnp.max(s, axis=-1, keepdims=True)
        p = jnp.exp(s)
        p = p * pl.reciprocal(jnp.sum(p, axis=-1, keepdims=True), approx=True)
        ctx.append(jnp.dot(p.astype(v.dtype), v, preferred_element_type=jnp.float32))
    # head-concat -> one lane-dense (S, E) store instead of H D-wide masked stores
    o_ref[0] = jnp.concatenate(ctx, axis=-1).astype(o_ref.dtype)


def attention_pallas(qkv, mask, num_heads):
    """qkv: (B, S, 3E); mask: (B, S) of 0/1. Returns (B, S, E) head-concat ctx."""
    # TODO(synk): flash-style KV tiling (online softmax) for long sequences; each
    # program currently materializes H small (S, S) score blocks.
    B, S, E3 = qkv.shape
    E = E3 // 3
    D = E // num_heads
    mask3 = mask.reshape(B, 1, S).astype(qkv.dtype)
    kernel = functools.partial(_attn_kernel, num_heads=num_heads,
                               scale=1.0 / float(D) ** 0.5)
    itemsize = qkv.dtype.itemsize
    step_bytes = (S * E3 + S + S * E) * itemsize + num_heads * S * S * 4
    flops = int(4 * B * num_heads * S * S * D)
    bytes_accessed = int((qkv.size + mask3.size + B * S * E) * itemsize)
    return pl.pallas_call(
        kernel,
        out_shape=jax.ShapeDtypeStruct((B, S, E), qkv.dtype),
        grid_spec=pltpu.PrefetchScalarGridSpec(
            num_scalar_prefetch=0,
            grid=(B,),
            in_specs=[
                pl.BlockSpec((1, S, E3), lambda b: (b, 0, 0)),
                pl.BlockSpec((1, 1, S), lambda b: (b, 0, 0)),
            ],
            out_specs=pl.BlockSpec((1, S, E), lambda b: (b, 0, 0)),
        ),
        compiler_params=pltpu.CompilerParams(
            dimension_semantics=("parallel",),
            vmem_limit_bytes=_vmem_limit_bytes(step_bytes)),
        cost_estimate=pl.CostEstimate(flops=flops,
                                      transcendentals=int(B * num_heads * S * S),
                                      bytes_accessed=bytes_accessed),
    )(qkv, mask3)


# ----------------------------------------------------------------------------
# Fused LayerNorm2 + FeedForward + residual:
#   out = x + (relu(LN(x) @ W1 + b1) @ W2 + b2)
# ff reduction axis last; the f32 output block is the accumulator (no scratch).
# ----------------------------------------------------------------------------
def _ln_ffn_residual_kernel(x_ref, g_ref, b_ref, w1_ref, b1_ref, w2_ref, b2_ref,
                            o_ref, nx_ref):
    k = pl.program_id(1)                            # ff-chunk reduction axis

    @pl.when(k == 0)
    def _():
        xx = x_ref[...].astype(jnp.float32)
        mu = jnp.mean(xx, axis=-1, keepdims=True)
        var = jnp.mean(jnp.square(xx - mu), axis=-1, keepdims=True)
        nx_ref[...] = (xx - mu) * jax.lax.rsqrt(var + _LN_EPS) * g_ref[...] + b_ref[...]
        o_ref[...] = jnp.zeros_like(o_ref)          # f32 output doubles as accumulator

    h = jnp.dot(nx_ref[...].astype(w1_ref.dtype), w1_ref[...],
                preferred_element_type=jnp.float32)
    h = jnp.maximum(h + b1_ref[...], 0.0)           # bias + ReLU per ff chunk
    o_ref[...] += jnp.dot(h.astype(w2_ref.dtype), w2_ref[...],
                          preferred_element_type=jnp.float32)

    @pl.when(k == pl.num_programs(1) - 1)
    def _():
        o_ref[...] = (o_ref[...] + b2_ref[...] + x_ref[...]).astype(o_ref.dtype)


def _ffn_step_bytes(bm, emb, bff, itemsize):
    streamed = (emb * bff + bff + bff * emb) * itemsize        # w1 / b1 / w2 chunks
    resident = (2 * bm * emb + 3 * emb) * itemsize + bm * emb * 4  # x, out, ln/b2, nx
    return 2 * streamed + resident


def ln_ffn_residual_pallas(x2d, gamma, beta, w1, b1, w2, b2, *,
                           block_m_hint=512, block_ff_hint=1024):
    m, emb = x2d.shape
    ff = w1.shape[1]
    assert emb % 128 == 0 and ff % 128 == 0, "emb/ff must be lane-aligned (x128)"
    # f32 output block is used as the reduction accumulator directly.
    # TODO(synk): for bf16 activations add a separate f32 VMEM accumulator.
    assert x2d.dtype == jnp.float32
    bm = _pick_block_m(m, block_m_hint)
    itemsize = x2d.dtype.itemsize
    budget = _vmem_capacity_bytes()
    bff = _pick_tile(ff, block_ff_hint)
    # generation-aware shrink: v7x has 64 MiB VMEM vs 128 MiB on v5e/v6e.
    while bff > 128 and _ffn_step_bytes(bm, emb, bff, itemsize) > 0.6 * budget:
        bff = _pick_tile(ff, bff - 128)
    grid = (pl.cdiv(m, bm), ff // bff)              # reduction axis last
    step_bytes = _ffn_step_bytes(bm, emb, bff, itemsize)
    flops = int(4 * m * emb * ff)
    bytes_accessed = int((x2d.size + gamma.size + beta.size + w1.size + b1.size
                          + w2.size + b2.size + m * emb) * itemsize)
    return pl.pallas_call(
        _ln_ffn_residual_kernel,
        out_shape=jax.ShapeDtypeStruct((m, emb), x2d.dtype),
        grid_spec=pltpu.PrefetchScalarGridSpec(
            num_scalar_prefetch=0,
            grid=grid,
            in_specs=[
                pl.BlockSpec((bm, emb), lambda i, k: (i, 0)),    # x (resident over k)
                pl.BlockSpec((1, emb), lambda i, k: (0, 0)),     # ln2 gamma
                pl.BlockSpec((1, emb), lambda i, k: (0, 0)),     # ln2 beta
                pl.BlockSpec((emb, bff), lambda i, k: (0, k)),   # w1 ff-chunk
                pl.BlockSpec((1, bff), lambda i, k: (0, k)),     # b1 ff-chunk
                pl.BlockSpec((bff, emb), lambda i, k: (k, 0)),   # w2 ff-chunk
                pl.BlockSpec((1, emb), lambda i, k: (0, 0)),     # b2 full
            ],
            out_specs=pl.BlockSpec((bm, emb), lambda i, k: (i, 0)),
            scratch_shapes=[pltpu.VMEM((bm, emb), jnp.float32)],    # cached LN2(x)
        ),
        compiler_params=pltpu.CompilerParams(
            dimension_semantics=("parallel", "arbitrary"),
            vmem_limit_bytes=_vmem_limit_bytes(step_bytes)),
        cost_estimate=pl.CostEstimate(flops=flops, transcendentals=0,
                                      bytes_accessed=bytes_accessed),
    )(x2d, gamma.reshape(1, emb), beta.reshape(1, emb), w1, b1.reshape(1, ff),
      w2, b2.reshape(1, emb))


# ----------------------------------------------------------------------------
# DecoderLayer / DecoderStack forward (eval mode) — 4 fused pallas_calls/layer
# ----------------------------------------------------------------------------
def decoder_layer_pallas(x, mask, p):
    B, S, E = x.shape
    x2d = x.reshape(-1, E)
    # 1) LayerNorm1 fused into the QKV projection.
    qkv = ln_linear_pallas(x2d, p["ln1_g"], p["ln1_b"], p["wqkv"], p["bqkv"])
    # 2) multi-head masked attention straight off the (B, S, 3E) QKV slab.
    ctx = attention_pallas(qkv.reshape(B, S, 3 * E), mask, p["num_heads"])
    # 3) output projection with the residual (x + attn) fused in the epilogue.
    res2d = linear_residual_pallas(ctx.reshape(-1, E), p["wo"], p["bo"], x2d)
    # 4) LayerNorm2 + FFN + residual fused; ff-dim tiled, accumulate into o_ref.
    out2d = ln_ffn_residual_pallas(res2d, p["ln2_g"], p["ln2_b"],
                                   p["w1"], p["b1"], p["w2"], p["b2"])
    # TODO(synk): training-mode dropout omitted — this is eval-mode forward.
    return out2d.reshape(B, S, E)


def decoder_stack_pallas(x, mask, layer_params):
    out = x
    for p in layer_params:
        out = decoder_layer_pallas(out, mask, p)
    return out


# ----------------------------------------------------------------------------
# Parameter init (torch-style uniform ±1/sqrt(fan_in); LN gamma=1, beta=0)
# ----------------------------------------------------------------------------
def init_decoder_stack_params(key, emb, num_layers, num_heads, ff,
                              dtype=jnp.float32):
    params = []
    bound_e = 1.0 / (emb ** 0.5)
    bound_f = 1.0 / (ff ** 0.5)
    for _ in range(num_layers):
        key, *ks = jax.random.split(key, 9)
        params.append(dict(
            num_heads=num_heads,
            ln1_g=jnp.ones((emb,), dtype), ln1_b=jnp.zeros((emb,), dtype),
            ln2_g=jnp.ones((emb,), dtype), ln2_b=jnp.zeros((emb,), dtype),
            wqkv=jax.random.uniform(ks[0], (emb, 3 * emb), dtype, -bound_e, bound_e),
            bqkv=jax.random.uniform(ks[1], (3 * emb,), dtype, -bound_e, bound_e),
            wo=jax.random.uniform(ks[2], (emb, emb), dtype, -bound_e, bound_e),
            bo=jax.random.uniform(ks[3], (emb,), dtype, -bound_e, bound_e),
            w1=jax.random.uniform(ks[4], (emb, ff), dtype, -bound_e, bound_e),
            b1=jax.random.uniform(ks[5], (ff,), dtype, -bound_e, bound_e),
            w2=jax.random.uniform(ks[6], (ff, emb), dtype, -bound_f, bound_f),
            b2=jax.random.uniform(ks[7], (emb,), dtype, -bound_f, bound_f),
        ))
    return params


# ----------------------------------------------------------------------------
# Pure-JAX reference (mirrors the PyTorch DecoderStack forward, eval mode)
# ----------------------------------------------------------------------------
def decoder_stack_ref(x, mask, layer_params):
    def layernorm(t, g, b):
        mu = jnp.mean(t, -1, keepdims=True)
        var = jnp.mean(jnp.square(t - mu), -1, keepdims=True)
        return (t - mu) * jax.lax.rsqrt(var + _LN_EPS) * g + b

    out = x
    B, S, E = x.shape
    for p in layer_params:
        H = p["num_heads"]
        D = E // H
        nx = layernorm(out, p["ln1_g"], p["ln1_b"])
        qkv = nx @ p["wqkv"] + p["bqkv"]
        q, k, v = jnp.split(qkv, 3, axis=-1)
        heads = lambda t: t.reshape(B, S, H, D).transpose(0, 2, 1, 3)
        q, k, v = heads(q), heads(k), heads(v)
        s = jnp.einsum("bhqd,bhkd->bhqk", q, k) / (D ** 0.5)
        s = jnp.where(mask[:, None, None, :] == 0, -1e9, s)
        a = jax.nn.softmax(s, axis=-1)
        ctx = jnp.einsum("bhqk,bhkd->bhqd", a, v)
        ctx = ctx.transpose(0, 2, 1, 3).reshape(B, S, E)
        attn = ctx @ p["wo"] + p["bo"]
        res = out + attn
        nres = layernorm(res, p["ln2_g"], p["ln2_b"])
        ffn = jnp.maximum(nres @ p["w1"] + p["b1"], 0.0) @ p["w2"] + p["b2"]
        out = res + ffn
    return out


if __name__ == "__main__":
    batch, seq, emb, heads, ff, layers = 2, 8, 128, 4, 256, 2

    key = jax.random.PRNGKey(0)
    kx, kp = jax.random.split(key)
    x = jax.random.normal(kx, (batch, seq, emb), dtype=jnp.float32)
    # Deterministic mask: batch 0 fully visible, batch 1 has last 2 keys masked.
    mask = jnp.ones((batch, seq), dtype=jnp.float32)
    mask = mask.at[1, -2:].set(0.0)

    params = init_decoder_stack_params(kp, emb, layers, heads, ff)

    out = decoder_stack_pallas(x, mask, params)
    jax.block_until_ready(out)

    ref = decoder_stack_ref(x, mask, params)
    assert out.shape == (batch, seq, emb)
    err = float(jnp.max(jnp.abs(out - ref)))
    # tolerance allows for the approx (EUP) reciprocal in the softmax normalizer
    assert jnp.allclose(out, ref, atol=5e-3, rtol=5e-3), f"max abs err {err}"

    print("KERNEL_OK")
</pallas_src>

<mosaic_0001>
module attributes {stable_mosaic.version = 11 : i64} {
  func.func @_ln_linear_kernel(%arg0: i32, %arg1: i32, %arg2: memref<8x128xf32, #tpu.memory_space<vmem>>, %arg3: memref<1x128xf32, #tpu.memory_space<vmem>>, %arg4: memref<1x128xf32, #tpu.memory_space<vmem>>, %arg5: memref<128x384xf32, #tpu.memory_space<vmem>>, %arg6: memref<1x384xf32, #tpu.memory_space<vmem>>, %arg7: memref<8x384xf32, #tpu.memory_space<vmem>>, %arg8: memref<8x128xf32, #tpu.memory_space<vmem>>) attributes {dimension_semantics = [#tpu.dimension_semantics<parallel>, #tpu.dimension_semantics<arbitrary>], iteration_bounds = array<i64: 2, 1>, scalar_prefetch = 0 : i64, scratch_operands = 1 : i64, tpu.core_type = #tpu.core_type<tc>, window_params = [{transform_indices = @transform_0, window_bounds = array<i64: 8, 128>}, {pipeline_mode = #tpu.pipeline_mode<synchronous>, transform_indices = @transform_1, window_bounds = array<i64: 1, 128>}, {pipeline_mode = #tpu.pipeline_mode<synchronous>, transform_indices = @transform_2, window_bounds = array<i64: 1, 128>}, {transform_indices = @transform_3, window_bounds = array<i64: 128, 384>}, {transform_indices = @transform_4, window_bounds = array<i64: 1, 384>}, {transform_indices = @transform_5, window_bounds = array<i64: 8, 384>}]} {
    %c0_i32 = arith.constant 0 : i32
    %0 = arith.cmpi eq, %arg1, %c0_i32 : i32
    %1 = arith.extui %0 : i1 to i32
    %c0_i32_0 = arith.constant 0 : i32
    %2 = arith.cmpi ne, %1, %c0_i32_0 : i32
    scf.if %2 {
      %c0_8 = arith.constant 0 : index
      %c0_9 = arith.constant 0 : index
      %10 = vector.load %arg2[%c0_8, %c0_9] : memref<8x128xf32, #tpu.memory_space<vmem>>, vector<8x128xf32>
      %cst_10 = arith.constant dense<0.000000e+00> : vector<8xf32>
      %11 = vector.multi_reduction <add>, %10, %cst_10 [1] : vector<8x128xf32> to vector<8xf32>
      %12 = vector.shape_cast %11 : vector<8xf32> to vector<8x1xf32>
      %cst_11 = arith.constant 1.280000e+02 : f32
      %13 = vector.broadcast %cst_11 : f32 to vector<8x1xf32>
      %14 = arith.divf %12, %13 : vector<8x1xf32>
      %15 = vector.broadcast %14 : vector<8x1xf32> to vector<8x128xf32>
      %16 = arith.subf %10, %15 : vector<8x128xf32>
      %17 = arith.mulf %16, %16 : vector<8x128xf32>
      %cst_12 = arith.constant dense<0.000000e+00> : vector<8xf32>
      %18 = vector.multi_reduction <add>, %17, %cst_12 [1] : vector<8x128xf32> to vector<8xf32>
      %19 = vector.shape_cast %18 : vector<8xf32> to vector<8x1xf32>
      %cst_13 = arith.constant 1.280000e+02 : f32
      %20 = vector.broadcast %cst_13 : f32 to vector<8x1xf32>
      %21 = arith.divf %19, %20 : vector<8x1xf32>
      %22 = vector.broadcast %14 : vector<8x1xf32> to vector<8x128xf32>
      %23 = arith.subf %10, %22 : vector<8x128xf32>
      %cst_14 = arith.constant 9.99999974E-6 : f32
      %24 = vector.broadcast %cst_14 : f32 to vector<8x1xf32>
      %25 = arith.addf %21, %24 : vector<8x1xf32>
      %26 = math.rsqrt %25 : vector<8x1xf32>
      %27 = vector.broadcast %26 : vector<8x1xf32> to vector<8x128xf32>
      %28 = arith.mulf %23, %27 : vector<8x128xf32>
      %c0_15 = arith.constant 0 : index
      %c0_16 = arith.constant 0 : index
      %29 = vector.load %arg3[%c0_15, %c0_16] : memref<1x128xf32, #tpu.memory_space<vmem>>, vector<1x128xf32>
      %30 = vector.broadcast %29 : vector<1x128xf32> to vector<8x128xf32>
      %31 = arith.mulf %28, %30 : vector<8x128xf32>
      %c0_17 = arith.constant 0 : index
      %c0_18 = arith.constant 0 : index
      %32 = vector.load %arg4[%c0_17, %c0_18] : memref<1x128xf32, #tpu.memory_space<vmem>>, vector<1x128xf32>
      %33 = vector.broadcast %32 : vector<1x128xf32> to vector<8x128xf32>
      %34 = arith.addf %31, %33 : vector<8x128xf32>
      %c0_19 = arith.constant 0 : index
      %c0_20 = arith.constant 0 : index
      %35 = vector.load %arg8[%c0_19, %c0_20] : memref<8x128xf32, #tpu.memory_space<vmem>>, vector<8x128xf32>
      tpu.vector_store %arg8[%c0_19, %c0_20], %34 {strides = array<i32>} : memref<8x128xf32, #tpu.memory_space<vmem>>, vector<8x128xf32>,
    } else {
    }
    %c0 = arith.constant 0 : index
    %c0_1 = arith.constant 0 : index
    %3 = vector.load %arg8[%c0, %c0_1] : memref<8x128xf32, #tpu.memory_space<vmem>>, vector<8x128xf32>
    %c0_2 = arith.constant 0 : index
    %c0_3 = arith.constant 0 : index
    %4 = vector.load %arg5[%c0_2, %c0_3] : memref<128x384xf32, #tpu.memory_space<vmem>>, vector<128x384xf32>
    %cst = arith.constant dense<0.000000e+00> : vector<8x384xf32>
    %5 = tpu.matmul %3, %4, %cst {dimension_numbers = #tpu.dot_dimension_numbers<[1], [0], [0], [1], [0, 0, 1, 1], [], []>} : vector<8x128xf32>, vector<128x384xf32>, vector<8x384xf32> -> vector<8x384xf32>
    %c0_4 = arith.constant 0 : index
    %c0_5 = arith.constant 0 : index
    %6 = vector.load %arg6[%c0_4, %c0_5] : memref<1x384xf32, #tpu.memory_space<vmem>>, vector<1x384xf32>
    %7 = vector.broadcast %6 : vector<1x384xf32> to vector<8x384xf32>
    %8 = arith.addf %5, %7 : vector<8x384xf32>
    %c0_6 = arith.constant 0 : index
    %c0_7 = arith.constant 0 : index
    %9 = vector.load %arg7[%c0_6, %c0_7] : memref<8x384xf32, #tpu.memory_space<vmem>>, vector<8x384xf32>
    tpu.vector_store %arg7[%c0_6, %c0_7], %8 {strides = array<i32>} : memref<8x384xf32, #tpu.memory_space<vmem>>, vector<8x384xf32>,
    return
  }
  func.func @transform_0(%arg0: i32, %arg1: i32) -> (i32, i32) {
    %c0_i32 = arith.constant 0 : i32
    %c0_i32_0 = arith.constant 0 : i32
    return %arg0, %c0_i32 : i32, i32
  }
  func.func @transform_1(%arg0: i32, %arg1: i32) -> (i32, i32) {
    %c0_i32 = arith.constant 0 : i32
    %c0_i32_0 = arith.constant 0 : i32
    %c0_i32_1 = arith.constant 0 : i32
    return %c0_i32, %c0_i32_0 : i32, i32
  }
  func.func @transform_2(%arg0: i32, %arg1: i32) -> (i32, i32) {
    %c0_i32 = arith.constant 0 : i32
    %c0_i32_0 = arith.constant 0 : i32
    %c0_i32_1 = arith.constant 0 : i32
    return %c0_i32, %c0_i32_0 : i32, i32
  }
  func.func @transform_3(%arg0: i32, %arg1: i32) -> (i32, i32) {
    %c0_i32 = arith.constant 0 : i32
    %c0_i32_0 = arith.constant 0 : i32
    return %c0_i32, %arg1 : i32, i32
  }
  func.func @transform_4(%arg0: i32, %arg1: i32) -> (i32, i32) {
    %c0_i32 = arith.constant 0 : i32
    %c0_i32_0 = arith.constant 0 : i32
    return %c0_i32, %arg1 : i32, i32
  }
  func.func @transform_5(%arg0: i32, %arg1: i32) -> (i32, i32) {
    %c0_i32 = arith.constant 0 : i32
    return %arg0, %arg1 : i32, i32
  }
}

</mosaic_0001>

<llo_original>
// kernel: tpu_custom_call.1
$region0: #{tpu_custom_call.1}
  #allocation0 [shape = 'u32[]', space=smem, size = 0x4, offset = 0x4, fixed_abs, tag = 'smem constant byte address 0x4 - core index']
  #allocation1 [shape = 'u32[144,128]{1,0:T(1,128)}', space=vmem, size = 0x12000, scoped, tag = 'internal scratch']
  #allocation2 [shape = 'f32[8,128]{1,0:T(8,128)}', space=vmem, size = 0x1000, scoped, tag = 'scratch operand']
  %s0 = inlined_call_operand.hbm [shape: f32[16,128], index: 0, kind: input, shape index: {}]
  %s1 = inlined_call_operand.vmem [shape: f32[1,128], index: 1, kind: input, shape index: {}]
  %s2 = inlined_call_operand.vmem [shape: f32[1,128], index: 2, kind: input, shape index: {}]
  %s3 = inlined_call_operand.hbm [shape: f32[128,384], index: 3, kind: input, shape index: {}]
  %s4 = inlined_call_operand.vmem [shape: f32[1,384], index: 4, kind: input, shape index: {}]
  %s5 = inlined_call_operand.hbm [shape: f32[16,384], index: 5, kind: output, shape index: {}]
  %s6 = sld [smem:[#allocation0]]
  $region65: #{tpu_custom_call.1} parent=0
    _
  %s8 = ssub.s32 1, %s6
  %s9 = scalar_select 0, %s8, %s6
  $region1: #{tpu_custom_call.1} parent=0
    #allocation3 [shape = 'u8[8192]{0}', space=vmem, size = 0x2000, scoped, tag = 'input window, operand 0']
    #allocation4 [shape = 's32[2]{0}', space=sflag, size = 0x8, scoped, tag = 'scoped memory for tpu_custom_call.1']
    #allocation5 [shape = 's32[2]{0}', space=sflag, size = 0x8, scoped, tag = 'scoped memory for tpu_custom_call.1']
    #allocation6 [shape = 'u8[196608]{0}', space=vmem, size = 0x30000, scoped, tag = 'input window, operand 3, single buffered']
    #allocation7 [shape = 's32[1]{0}', space=sflag, size = 0x4, scoped, tag = 'scoped memory for tpu_custom_call.1']
    #allocation8 [shape = 'u8[24576]{0}', space=vmem, size = 0x6000, scoped, tag = 'output window, operand 0']
    %10 = vsyncpa [#allocation4], 0
    %s11 = scalar_lea.sflag [#allocation4], 1
    %12 = vsyncpa %s11, 0
    %13 = vsyncpa [#allocation7], 0
    %14 = vsyncpa [#allocation5], 0
    %s15 = scalar_lea.sflag [#allocation5], 1
    %16 = vsyncpa %s15, 0
    loop: start=0, step=1, limit=4
    $region2: #{tpu_custom_call.1} parent=1 // loop_pre_header
      _
    $region3: #{tpu_custom_call.1} parent=1 // loop_header
      %s18 = sphi 0, %s22
      %p19 = scmp.ge.s32.totalorder %s18, 4
      %s25 = sphi 0, %s37
      %s26 = sphi 0, %s33
      %s27 = sphi 0, %s25
      %s28 = sphi 0, %s26
      %s29 = sphi 0, %s27
      %s30 = sphi 0, %s28
      %s40 = sphi 0, %s42
      %s43 = sphi 0, %s40
      %s44 = sphi 0, %s43
      %s60 = sphi 0, %s44
      %s64 = sphi 0, %s64
      %s66 = sphi 0, %s64
      %s67 = sphi 0, %s66
      %s81 = sphi 0, %s67
      %s85 = sphi 0, %s85
      %s87 = sphi 0, %s85
      %s88 = sphi 0, %s87
      %s102 = sphi 0, %s88
      %s108 = sphi 0, %s110
      %s111 = sphi 0, %s108
      %s112 = sphi 0, %s111
      %s128 = sphi 0, %s112
      %s134 = sphi 0, %s136
      %s137 = sphi 0, %s134
      %s138 = sphi 0, %s137
      %s154 = sphi 0, %s138
      %s162 = sphi 0, %s164
      %s165 = sphi 0, %s162
      %s166 = sphi 0, %s165
      %s182 = sphi 0, %s166
    $region4: #{tpu_custom_call.1} parent=1 // loop_header_branch
      %21 = sbr.rel (%p19) target = $region8
    $region5: #{tpu_custom_call.1} parent=1 // loop_body
      %s23 = ssub.s32 %s18, 1
      %s24 = ssub.s32 %s18, 2
      %s31 = sadd.s32 1, %s26
      %p32 = scmp.ge.s32.totalorder %s31, 1
      %s33 = scalar_select %p32, 0, %s31
      %s34 = sadd.s32 1, %s25
      %s35 = scalar_select %p32, %s34, %s25
      %p36 = scmp.ge.s32.totalorder %s35, 2
      %s37 = scalar_select %p36, 0, %s35
      %s38 = ssub.s32 %s25, %s37
      %p39 = scmp.eq.s32.totalorder %s38, 0
      %s41 = sadd.s32 %s40, 1
      %s42 = scalar_select %p39, %s40, %s41
      %p45 = pneg %p39
      %p46 = scmp.eq.s32.totalorder %s18, 1
      %p47 = por %p45, %p46
      %p48 = scmp.ne.s32.totalorder %s40, %s43
      %p49 = scmp.eq.s32.totalorder %s18, 0
      %p50 = por %p48, %p49
      %p51 = scmp.ne.s32.totalorder %s40, %s43
      %p52 = scmp.eq.s32.totalorder %s23, 1
      %p53 = por %p51, %p52
      %p54 = scmp.ne.s32.totalorder %s43, %s44
      %p55 = scmp.eq.s32.totalorder %s23, 0
      %p56 = por %p54, %p55
      %p57 = scmp.ne.s32.totalorder %s43, %s44
      %p58 = scmp.eq.s32.totalorder %s24, 1
      %p59 = por %p57, %p58
      %p61 = scmp.ne.s32.totalorder %s44, %s60
      %p62 = scmp.eq.s32.totalorder %s24, 0
      %p63 = por %p61, %p62
      %s65 = sadd.s32 %s64, 1
      %p68 = scmp.eq.s32.totalorder %s18, 1
      %p69 = scmp.ne.s32.totalorder %s64, %s66
      %p70 = scmp.eq.s32.totalorder %s18, 0
      %p71 = por %p69, %p70
      %p72 = scmp.ne.s32.totalorder %s64, %s66
      %p73 = scmp.eq.s32.totalorder %s23, 1
      %p74 = por %p72, %p73
      %p75 = scmp.ne.s32.totalorder %s66, %s67
      %p76 = scmp.eq.s32.totalorder %s23, 0
      %p77 = por %p75, %p76
      %p78 = scmp.ne.s32.totalorder %s66, %s67
      %p79 = scmp.eq.s32.totalorder %s24, 1
      %p80 = por %p78, %p79
      %p82 = scmp.ne.s32.totalorder %s67, %s81
      %p83 = scmp.eq.s32.totalorder %s24, 0
      %p84 = por %p82, %p83
      %s86 = sadd.s32 %s85, 1
      %p89 = scmp.eq.s32.totalorder %s18, 1
      %p90 = scmp.ne.s32.totalorder %s85, %s87
      %p91 = scmp.eq.s32.totalorder %s18, 0
      %p92 = por %p90, %p91
      %p93 = scmp.ne.s32.totalorder %s85, %s87
      %p94 = scmp.eq.s32.totalorder %s23, 1
      %p95 = por %p93, %p94
      %p96 = scmp.ne.s32.totalorder %s87, %s88
      %p97 = scmp.eq.s32.totalorder %s23, 0
      %p98 = por %p96, %p97
      %p99 = scmp.ne.s32.totalorder %s87, %s88
      %p100 = scmp.eq.s32.totalorder %s24, 1
      %p101 = por %p99, %p100
      %p103 = scmp.ne.s32.totalorder %s88, %s102
      %p104 = scmp.eq.s32.totalorder %s24, 0
      %p105 = por %p103, %p104
      %s106 = ssub.s32 %s26, %s33
      %p107 = scmp.eq.s32.totalorder %s106, 0
      %s109 = sadd.s32 %s108, 1
      %s110 = scalar_select %p107, %s108, %s109
      %p113 = pneg %p107
      %p114 = scmp.eq.s32.totalorder %s18, 1
      %p115 = por %p113, %p114
      %p116 = scmp.ne.s32.totalorder %s108, %s111
      %p117 = scmp.eq.s32.totalorder %s18, 0
      %p118 = por %p116, %p117
      %p119 = scmp.ne.s32.totalorder %s108, %s111
      %p120 = scmp.eq.s32.totalorder %s23, 1
      %p121 = por %p119, %p120
      %p122 = scmp.ne.s32.totalorder %s111, %s112
      %p123 = scmp.eq.s32.totalorder %s23, 0
      %p124 = por %p122, %p123
      %p125 = scmp.ne.s32.totalorder %s111, %s112
      %p126 = scmp.eq.s32.totalorder %s24, 1
      %p127 = por %p125, %p126
      %p129 = scmp.ne.s32.totalorder %s112, %s128
      %p130 = scmp.eq.s32.totalorder %s24, 0
      %p131 = por %p129, %p130
      %s132 = ssub.s32 %s26, %s33
      %p133 = scmp.eq.s32.totalorder %s132, 0
      %s135 = sadd.s32 %s134, 1
      %s136 = scalar_select %p133, %s134, %s135
      %p139 = pneg %p133
      %p140 = scmp.eq.s32.totalorder %s18, 1
      %p141 = por %p139, %p140
      %p142 = scmp.ne.s32.totalorder %s134, %s137
      %p143 = scmp.eq.s32.totalorder %s18, 0
      %p144 = por %p142, %p143
      %p145 = scmp.ne.s32.totalorder %s134, %s137
      %p146 = scmp.eq.s32.totalorder %s23, 1
      %p147 = por %p145, %p146
      %p148 = scmp.ne.s32.totalorder %s137, %s138
      %p149 = scmp.eq.s32.totalorder %s23, 0
      %p150 = por %p148, %p149
      %p151 = scmp.ne.s32.totalorder %s137, %s138
      %p152 = scmp.eq.s32.totalorder %s24, 1
      %p153 = por %p151, %p152
      %p155 = scmp.ne.s32.totalorder %s138, %s154
      %p156 = scmp.eq.s32.totalorder %s24, 0
      %p157 = por %p155, %p156
      %s158 = ssub.s32 %s25, %s37
      %s159 = ssub.s32 %s26, %s33
      %s160 = sor.u32 %s158, %s159
      %p161 = scmp.eq.s32.totalorder %s160, 0
      %s163 = sadd.s32 %s162, 1
      %s164 = scalar_select %p161, %s162, %s163
      %p167 = pneg %p161
      %p168 = scmp.eq.s32.totalorder %s18, 1
      %p169 = por %p167, %p168
      %p170 = scmp.ne.s32.totalorder %s162, %s165
      %p171 = scmp.eq.s32.totalorder %s18, 0
      %p172 = por %p170, %p171
      %p173 = scmp.ne.s32.totalorder %s162, %s165
      %p174 = scmp.eq.s32.totalorder %s23, 1
      %p175 = por %p173, %p174
      %p176 = scmp.ne.s32.totalorder %s165, %s166
      %p177 = scmp.eq.s32.totalorder %s23, 0
      %p178 = por %p176, %p177
      %p179 = scmp.ne.s32.totalorder %s165, %s166
      %p180 = scmp.eq.s32.totalorder %s24, 1
      %p181 = por %p179, %p180
      %p183 = scmp.ne.s32.totalorder %s166, %s182
      %p184 = scmp.eq.s32.totalorder %s24, 0
      %p185 = por %p183, %p184
      %p186 = scmp.le.s32.totalorder 1, %s18
      %p187 = scmp.lt.s32.totalorder %s18, 3
      %p188 = pnand %p186, %p187
      %p189 = pneg %p188
      // Predicated region
      $region9: #{tpu_custom_call.1} parent=5 // pred_check
        _
      $region10: #{tpu_custom_call.1} parent=5 // pred_check_branch
        %191 = sbr.rel (%p188) target = $region12
      $region11: #{tpu_custom_call.1} parent=5 // pred_region
        %s192 = ssub.s32 %s18, 1
        // Predicated region
        $region13: #{tpu_custom_call.1} parent=11 // pred_check
          %p193 = pneg %p77
        $region14: #{tpu_custom_call.1} parent=11 // pred_check_branch
          %195 = sbr.rel (%p193) target = $region16
        $region15: #{tpu_custom_call.1} parent=11 // pred_region
          _
        $region16: #{tpu_custom_call.1} parent=11 // pred_fallthru
          _
        // Predicated region
        $region17: #{tpu_custom_call.1} parent=11 // pred_check
          %p196 = pneg %p98
        $region18: #{tpu_custom_call.1} parent=11 // pred_check_branch
          %198 = sbr.rel (%p196) target = $region20
        $region19: #{tpu_custom_call.1} parent=11 // pred_region
          _
        $region20: #{tpu_custom_call.1} parent=11 // pred_fallthru
          _
        // Predicated region
        $region21: #{tpu_custom_call.1} parent=11 // pred_check
          %p199 = pneg %p124
        $region22: #{tpu_custom_call.1} parent=11 // pred_check_branch
          %201 = sbr.rel (%p199) target = $region24
        $region23: #{tpu_custom_call.1} parent=11 // pred_region
          %s202 = smul.u32 3, %s28
          %s204 = ssub.s32 6144, 6144
          %205 = vsyncadd [#allocation7], %s204
          %s206 = smul.addr %s202, 128
          %s207 = scalar_lea.hbm %s3, %s206
          %s208 = sshll.u32 [#allocation6], 4
          %s209 = int_to_ptr.vmem [resolvable:$true] %s208
          %214 = dma.hbm_to_vmem [thread:$0]  %s207, 6144, %s209, [#allocation7], 384, 384, 24
        $region24: #{tpu_custom_call.1} parent=11 // pred_fallthru
          _
        // Predicated region
        $region25: #{tpu_custom_call.1} parent=11 // pred_check
          %p215 = pneg %p150
        $region26: #{tpu_custom_call.1} parent=11 // pred_check_branch
          %217 = sbr.rel (%p215) target = $region28
        $region27: #{tpu_custom_call.1} parent=11 // pred_region
          %s218 = smul.u32 3, %s28
          %p219 = scmp.lt.s32.totalorder %s218, 2
          %s220 = scalar_select %p219, %s218, 2
          %s221 = scalar_lea.vmem %s4, %s220
          %s222 = smul.u32 3, %s28
        $region28: #{tpu_custom_call.1} parent=11 // pred_fallthru
          _
      $region12: #{tpu_custom_call.1} parent=5 // pred_fallthru
        _
      %p223 = scmp.lt.s32.totalorder %s18, 2
      // Predicated region
      $region29: #{tpu_custom_call.1} parent=5 // pred_check
        %p224 = pneg %p223
      $region30: #{tpu_custom_call.1} parent=5 // pred_check_branch
        %226 = sbr.rel (%p224) target = $region32
      $region31: #{tpu_custom_call.1} parent=5 // pred_region
        // Predicated region
        $region33: #{tpu_custom_call.1} parent=31 // pred_check
          %p227 = pneg %p50
        $region34: #{tpu_custom_call.1} parent=31 // pred_check_branch
          %229 = sbr.rel (%p227) target = $region36
        $region35: #{tpu_custom_call.1} parent=31 // pred_region
          %s230 = sand.u32 %s40, 1
          %s231 = scalar_lea.sflag [#allocation4], %s230
          %s232 = sand.u32 %s40, 1
          %s233 = smul.addr %s232, 8
          %s234 = scalar_lea.vmem [#allocation3], %s233
          %s236 = ssub.s32 128, 128
          %237 = vsyncadd %s231, %s236
          %s238 = smul.addr %s25, 128
          %s239 = scalar_lea.hbm %s0, %s238
          %s241 = sshll.u32 %s234, 4
          %s242 = int_to_ptr.vmem [resolvable:$true] %s241
          %244 = dma.hbm_to_vmem [thread:$0]  %s239, 128, %s242, %s231
        $region36: #{tpu_custom_call.1} parent=31 // pred_fallthru
          _
      $region32: #{tpu_custom_call.1} parent=5 // pred_fallthru
        _
      %p245 = scmp.le.s32.totalorder 1, %s18
      %p246 = scmp.lt.s32.totalorder %s18, 3
      %p247 = pnand %p245, %p246
      %p248 = pneg %p247
      // Predicated region
      $region37: #{tpu_custom_call.1} parent=5 // pred_check
        _
      $region38: #{tpu_custom_call.1} parent=5 // pred_check_branch
        %250 = sbr.rel (%p247) target = $region40
      $region39: #{tpu_custom_call.1} parent=5 // pred_region
        %s251 = ssub.s32 %s18, 1
        %s252 = sand.u32 %s43, 1
        %s253 = scalar_lea.sflag [#allocation4], %s252
        %s254 = sand.u32 %s43, 1
        %s255 = smul.addr %s254, 8
        %s256 = scalar_lea.vmem [#allocation3], %s255
        // Predicated region
        $region41: #{tpu_custom_call.1} parent=39 // pred_check
          %p257 = pneg %p56
        $region42: #{tpu_custom_call.1} parent=39 // pred_check_branch
          %259 = sbr.rel (%p257) target = $region44
        $region43: #{tpu_custom_call.1} parent=39 // pred_region
          %260 = dma.done %s253, 128
        $region44: #{tpu_custom_call.1} parent=39 // pred_fallthru
          _
        // Predicated region
        $region45: #{tpu_custom_call.1} parent=39 // pred_check
          %p261 = pneg %p124
        $region46: #{tpu_custom_call.1} parent=39 // pred_check_branch
          %263 = sbr.rel (%p261) target = $region48
        $region47: #{tpu_custom_call.1} parent=39 // pred_region
          %264 = dma.done [#allocation7], 6144
        $region48: #{tpu_custom_call.1} parent=39 // pred_fallthru
          _
        %s265 = sand.u32 %s43, 1
        %s266 = scalar_lea.sflag [#allocation4], %s265
        %s267 = sand.u32 %s43, 1
        %s268 = smul.addr %s267, 8
        %s269 = scalar_lea.vmem [#allocation3], %s268
        %p270 = pneg %p56
        %p271 = pneg %p53
        %p272 = pneg %p77
        %p273 = pneg %p74
        %p274 = pneg %p98
        %p275 = pneg %p95
        %p276 = pneg %p124
        %p277 = pneg %p121
        %s278 = smul.u32 3, %s28
        %p279 = scmp.lt.s32.totalorder %s278, 2
        %s280 = scalar_select %p279, %s278, 2
        %s281 = scalar_lea.vmem %s4, %s280
        %p282 = pneg %p150
        %p283 = pneg %p147
        %p284 = pneg %p178
        %p285 = pneg %p175
        %s286 = sand.u32 %s165, 1
        %s287 = scalar_lea.sflag [#allocation5], %s286
        %s288 = sand.u32 %s165, 1
        %s289 = smul.addr %s288, 24
        %s290 = scalar_lea.vmem [#allocation8], %s289
        %s291 = smul.u32 3, %s28
        %s292 = smul.u32 3, %s28
        %p293 = scmp.lt.s32.totalorder %s292, 2
        %s294 = scalar_select %p293, %s292, 2
        %s295 = scalar_lea.vmem %s4, %s294
        %s296 = smul.u32 3, %s28
        %s297 = smul.u32 3, %s28
        %p298 = scmp.eq.s32.totalorder %s28, 0
        // Predicated region
        $region49: #{tpu_custom_call.1} parent=39 // pred_check
          %p299 = pneg %p298
        $region50: #{tpu_custom_call.1} parent=39 // pred_check_branch
          %301 = sbr.rel (%p299) target = $region52
        $region51: #{tpu_custom_call.1} parent=39 // pred_region
          %v302 = vld [vmem:[%s256] sm:$0xff]
          %303 = vadd.xlane.f32.xlu0 %v302
          %v304 = vpop.xlane.xlu0 %303
          %v305 = vrcp.pop 128.0
          %v306 = vmul.f32 %v304, %v305
          %v307 = vsub.f32 %v302, %v306
          %v308 = vmul.f32 %v307, %v307
          %309 = vadd.xlane.f32.xlu0 %v308
          %v310 = vpop.xlane.xlu0 %309
          %v311 = vmul.f32 %v310, %v305
          %v312 = vadd.f32 %v311, 1e-05
          %v313 = vrsqrt.pop %v312
          %v314 = vmul.f32 %v307, %v313
          %v315 = vld [vmem:[%s1] sm:$0x1]
          %v317 = vlaneseq
          %v318 = vshrl.u32 %v317, 7
          %v319 = vsub.s32 0, %v318
          %v320 = vrot.slane %v315, %v319
          %v322 = vmul.f32 %v314, %v320
          %v323 = vld [vmem:[%s2] sm:$0x1]
          %v325 = vlaneseq
          %v326 = vshrl.u32 %v325, 7
          %v327 = vsub.s32 0, %v326
          %v328 = vrot.slane %v323, %v327
          %v330 = vadd.f32 %v322, %v328
          %331 = vst [vmem:[#allocation2] sm:$0xff] %v330
        $region52: #{tpu_custom_call.1} parent=39 // pred_fallthru
          _
        %v332 = vld [vmem:[#allocation2] sm:$0xff]
        %v333 = vld [vmem:[#allocation6] sm:$0xff]
        %v334 = vld [vmem:[#allocation6 + $0x8] sm:$0xff]
        %v335 = vld [vmem:[#allocation6 + $0x10] sm:$0xff]
        %v336 = vld [vmem:[#allocation6 + $0x18] sm:$0xff]
        %v337 = vld [vmem:[#allocation6 + $0x20] sm:$0xff]
        %v338 = vld [vmem:[#allocation6 + $0x28] sm:$0xff]
        %v339 = vld [vmem:[#allocation6 + $0x30] sm:$0xff]
        %v340 = vld [vmem:[#allocation6 + $0x38] sm:$0xff]
        %v341 = vld [vmem:[#allocation6 + $0x40] sm:$0xff]
        %v342 = vld [vmem:[#allocation6 + $0x48] sm:$0xff]
        %v343 = vld [vmem:[#allocation6 + $0x50] sm:$0xff]
        %v344 = vld [vmem:[#allocation6 + $0x58] sm:$0xff]
        %v345 = vld [vmem:[#allocation6 + $0x60] sm:$0xff]
        %v346 = vld [vmem:[#allocation6 + $0x68] sm:$0xff]
        %v347 = vld [vmem:[#allocation6 + $0x70] sm:$0xff]
        %v348 = vld [vmem:[#allocation6 + $0x78] sm:$0xff]
        %v349 = vld [vmem:[#allocation6 + $0x80] sm:$0xff]
        %v350 = vld [vmem:[#allocation6 + $0x88] sm:$0xff]
        %v351 = vld [vmem:[#allocation6 + $0x90] sm:$0xff]
        %v352 = vld [vmem:[#allocation6 + $0x98] sm:$0xff]
        %v353 = vld [vmem:[#allocation6 + $0xa0] sm:$0xff]
        %v354 = vld [vmem:[#allocation6 + $0xa8] sm:$0xff]
        %v355 = vld [vmem:[#allocation6 + $0xb0] sm:$0xff]
        %v356 = vld [vmem:[#allocation6 + $0xb8] sm:$0xff]
        %v357 = vld [vmem:[#allocation6 + $0xc0] sm:$0xff]
        %v358 = vld [vmem:[#allocation6 + $0xc8] sm:$0xff]
        %v359 = vld [vmem:[#allocation6 + $0xd0] sm:$0xff]
        %v360 = vld [vmem:[#allocation6 + $0xd8] sm:$0xff]
        %v361 = vld [vmem:[#allocation6 + $0xe0] sm:$0xff]
        %v362 = vld [vmem:[#allocation6 + $0xe8] sm:$0xff]
        %v363 = vld [vmem:[#allocation6 + $0xf0] sm:$0xff]
        %v364 = vld [vmem:[#allocation6 + $0xf8] sm:$0xff]
        %v365 = vld [vmem:[#allocation6 + $0x100] sm:$0xff]
        %v366 = vld [vmem:[#allocation6 + $0x108] sm:$0xff]
        %v367 = vld [vmem:[#allocation6 + $0x110] sm:$0xff]
        %v368 = vld [vmem:[#allocation6 + $0x118] sm:$0xff]
        %v369 = vld [vmem:[#allocation6 + $0x120] sm:$0xff]
        %v370 = vld [vmem:[#allocation6 + $0x128] sm:$0xff]
        %v371 = vld [vmem:[#allocation6 + $0x130] sm:$0xff]
        %v372 = vld [vmem:[#allocation6 + $0x138] sm:$0xff]
        %v373 = vld [vmem:[#allocation6 + $0x140] sm:$0xff]
        %v374 = vld [vmem:[#allocation6 + $0x148] sm:$0xff]
        %v375 = vld [vmem:[#allocation6 + $0x150] sm:$0xff]
        %v376 = vld [vmem:[#allocation6 + $0x158] sm:$0xff]
        %v377 = vld [vmem:[#allocation6 + $0x160] sm:$0xff]
        %v378 = vld [vmem:[#allocation6 + $0x168] sm:$0xff]
        %v379 = vld [vmem:[#allocation6 + $0x170] sm:$0xff]
        %v380 = vld [vmem:[#allocation6 + $0x178] sm:$0xff]
        %v381 = vld [vmem:[%s295] sm:$0x7]
        %v383 = vlaneseq
        %v384 = vshrl.u32 %v383, 7
        %v385 = vsub.s32 0, %v384
        %v386 = vrot.slane %v381, %v385
        %v387 = vlaneseq
        %v388 = vshrl.u32 %v387, 7
        %v389 = vsub.s32 1, %v388
        %v390 = vrot.slane %v381, %v389
        %v391 = vlaneseq
        %v392 = vshrl.u32 %v391, 7
        %v393 = vsub.s32 2, %v392
        %v394 = vrot.slane %v381, %v393
        %398 = vmatprep.subr.mxu0 %v334
        %399 = vmatpush1.msra.mxu0 %v333
        %400 = vmatprep.subr.mxu0 %v337
        %401 = vmatpush1.msra.mxu0 %v336
        %402 = vmatprep.subr.mxu0 %v340
        %403 = vmatpush1.msra.mxu0 %v339
        %404 = vmatprep.subr.mxu0 %v343
        %405 = vmatpush1.msra.mxu0 %v342
        %406 = vmatprep.subr.mxu0 %v346
        %407 = vmatpush1.msra.mxu0 %v345
        %408 = vmatprep.subr.mxu0 %v349
        %409 = vmatpush1.msra.mxu0 %v348
        %410 = vmatprep.subr.mxu0 %v352
        %411 = vmatpush1.msra.mxu0 %v351
        %412 = vmatprep.subr.mxu0 %v355
        %413 = vmatpush1.msra.mxu0 %v354
        %414 = vmatprep.subr.mxu0 %v358
        %415 = vmatpush1.msra.mxu0 %v357
        %416 = vmatprep.subr.mxu0 %v361
        %417 = vmatpush1.msra.mxu0 %v360
        %418 = vmatprep.subr.mxu0 %v364
        %419 = vmatpush1.msra.mxu0 %v363
        %420 = vmatprep.subr.mxu0 %v367
        %421 = vmatpush1.msra.mxu0 %v366
        %422 = vmatprep.subr.mxu0 %v370
        %423 = vmatpush1.msra.mxu0 %v369
        %424 = vmatprep.subr.mxu0 %v373
        %425 = vmatpush1.msra.mxu0 %v372
        %426 = vmatprep.subr.mxu0 %v376
        %427 = vmatpush1.msra.mxu0 %v375
        %428 = vmatprep.subr.mxu0 %v379
        %429 = vmatpush1.msra.mxu0 %v378
        %430 = vmatprep.subr.mxu0 0.0
        %431 = vmatpush1.msra.mxu0 0.0
        %432 = vmatprep.subr.mxu0 0.0
        %433 = vmatpush1.msra.mxu0 0.0
        %434 = vmatprep.subr.mxu0 0.0
        %435 = vmatpush1.msra.mxu0 0.0
        %436 = vmatprep.subr.mxu0 0.0
        %437 = vmatpush1.msra.mxu0 0.0
        %438 = vmatprep.subr.mxu0 0.0
        %439 = vmatpush1.msra.mxu0 0.0
        %440 = vmatprep.subr.mxu0 0.0
        %441 = vmatpush1.msra.mxu0 0.0
        %442 = vmatprep.subr.mxu0 0.0
        %443 = vmatpush1.msra.mxu0 0.0
        %444 = vmatprep.subr.mxu0 0.0
        %445 = vmatpush1.msra.mxu0 0.0
        %446 = vmatprep.subr.mxu0 0.0
        %447 = vmatpush1.msra.mxu0 0.0
        %448 = vmatprep.subr.mxu0 0.0
        %449 = vmatpush1.msra.mxu0 0.0
        %450 = vmatprep.subr.mxu0 0.0
        %451 = vmatpush1.msra.mxu0 0.0
        %452 = vmatprep.subr.mxu0 0.0
        %453 = vmatpush1.msra.mxu0 0.0
        %454 = vmatprep.subr.mxu0 0.0
        %455 = vmatpush1.msra.mxu0 0.0
        %456 = vmatprep.subr.mxu0 0.0
        %457 = vmatpush1.msra.mxu0 0.0
        %458 = vmatprep.subr.mxu0 0.0
        %459 = vmatpush1.msra.mxu0 0.0
        %460 = vmatprep.subr.mxu0 0.0
        %461 = vmatpush1.msra.mxu0 0.0
        %462 = vmatprep.mubr.f32.mxu0 0.0
        %463 = vmatmul.mubr.f32.gmra.mrb[0].mxu0 %v332
        %v464 = vpop.f32.mrb[0].mxu0
        %v465 = vadd.f32 %v386, %v464
        %v466 = vpop.f32.mrb[0].mxu0
        %v467 = vadd.f32 %v390, %v466
        %468 = vdwg.mxu0
        %469 = vmatprep.subr.mxu0 0.0
        %470 = vmatpush1.msra.mxu0 %v335
        %471 = vmatprep.subr.mxu0 0.0
        %472 = vmatpush1.msra.mxu0 %v338
        %473 = vmatprep.subr.mxu0 0.0
        %474 = vmatpush1.msra.mxu0 %v341
        %475 = vmatprep.subr.mxu0 0.0
        %476 = vmatpush1.msra.mxu0 %v344
        %477 = vmatprep.subr.mxu0 0.0
        %478 = vmatpush1.msra.mxu0 %v347
        %479 = vmatprep.subr.mxu0 0.0
        %480 = vmatpush1.msra.mxu0 %v350
        %481 = vmatprep.subr.mxu0 0.0
        %482 = vmatpush1.msra.mxu0 %v353
        %483 = vmatprep.subr.mxu0 0.0
        %484 = vmatpush1.msra.mxu0 %v356
        %485 = vmatprep.subr.mxu0 0.0
        %486 = vmatpush1.msra.mxu0 %v359
        %487 = vmatprep.subr.mxu0 0.0
        %488 = vmatpush1.msra.mxu0 %v362
        %489 = vmatprep.subr.mxu0 0.0
        %490 = vmatpush1.msra.mxu0 %v365
        %491 = vmatprep.subr.mxu0 0.0
        %492 = vmatpush1.msra.mxu0 %v368
        %493 = vmatprep.subr.mxu0 0.0
        %494 = vmatpush1.msra.mxu0 %v371
        %495 = vmatprep.subr.mxu0 0.0
        %496 = vmatpush1.msra.mxu0 %v374
        %497 = vmatprep.subr.mxu0 0.0
        %498 = vmatpush1.msra.mxu0 %v377
        %499 = vmatprep.subr.mxu0 0.0
        %500 = vmatpush1.msra.mxu0 %v380
        %501 = vmatprep.subr.mxu0 0.0
        %502 = vmatpush1.msra.mxu0 0.0
        %503 = vmatprep.subr.mxu0 0.0
        %504 = vmatpush1.msra.mxu0 0.0
        %505 = vmatprep.subr.mxu0 0.0
        %506 = vmatpush1.msra.mxu0 0.0
        %507 = vmatprep.subr.mxu0 0.0
        %508 = vmatpush1.msra.mxu0 0.0
        %509 = vmatprep.subr.mxu0 0.0
        %510 = vmatpush1.msra.mxu0 0.0
        %511 = vmatprep.subr.mxu0 0.0
        %512 = vmatpush1.msra.mxu0 0.0
        %513 = vmatprep.subr.mxu0 0.0
        %514 = vmatpush1.msra.mxu0 0.0
        %515 = vmatprep.subr.mxu0 0.0
        %516 = vmatpush1.msra.mxu0 0.0
        %517 = vmatprep.subr.mxu0 0.0
        %518 = vmatpush1.msra.mxu0 0.0
        %519 = vmatprep.subr.mxu0 0.0
        %520 = vmatpush1.msra.mxu0 0.0
        %521 = vmatprep.subr.mxu0 0.0
        %522 = vmatpush1.msra.mxu0 0.0
        %523 = vmatprep.subr.mxu0 0.0
        %524 = vmatpush1.msra.mxu0 0.0
        %525 = vmatprep.subr.mxu0 0.0
        %526 = vmatpush1.msra.mxu0 0.0
        %527 = vmatprep.subr.mxu0 0.0
        %528 = vmatpush1.msra.mxu0 0.0
        %529 = vmatprep.subr.mxu0 0.0
        %530 = vmatpush1.msra.mxu0 0.0
        %531 = vmatprep.subr.mxu0 0.0
        %532 = vmatpush1.msra.mxu0 0.0
        %533 = vmatprep.mubr.f32.mxu0 0.0
        %534 = vmatmul.mubr.f32.gmra.mrb[0].mxu0 %v332
        %v535 = vpop.f32.mrb[0].mxu0
        %v536 = vadd.f32 %v394, %v535
        %v537 = vpop.f32.mrb[0].mxu0
        %538 = vdwg.mxu0
        %539 = vst [vmem:[%s290] sm:$0xff] %v465
        %540 = vst [vmem:[%s290 + $0x8] sm:$0xff] %v467
        %541 = vst [vmem:[%s290 + $0x10] sm:$0xff] %v536
        %s542 = sand.u32 %s165, 1
        %s543 = scalar_lea.sflag [#allocation5], %s542
        %s544 = sand.u32 %s165, 1
        %s545 = smul.addr %s544, 24
        %s546 = scalar_lea.vmem [#allocation8], %s545
        // Predicated region
        $region53: #{tpu_custom_call.1} parent=39 // pred_check
          %p547 = pneg %p175
        $region54: #{tpu_custom_call.1} parent=39 // pred_check_branch
          %549 = sbr.rel (%p547) target = $region56
        $region55: #{tpu_custom_call.1} parent=39 // pred_region
          %s550 = smul.u32 3, %s28
          %s552 = ssub.s32 384, 384
          %553 = vsyncadd %s543, %s552
          %s554 = smul.addr %s27, 3
          %s555 = sadd.s32 %s550, %s554
          %s556 = smul.addr %s555, 128
          %s557 = scalar_lea.hbm %s5, %s556
          %s559 = sshll.u32 %s546, 4
          %s560 = int_to_ptr.vmem [resolvable:$true] %s559
          %562 = dma.vmem_to_hbm [thread:$0]  %s560, 384, %s557, %s543
        $region56: #{tpu_custom_call.1} parent=39 // pred_fallthru
          _
      $region40: #{tpu_custom_call.1} parent=5 // pred_fallthru
        _
      %p563 = scmp.le.s32.totalorder 2, %s18
      // Predicated region
      $region57: #{tpu_custom_call.1} parent=5 // pred_check
        %p564 = pneg %p563
      $region58: #{tpu_custom_call.1} parent=5 // pred_check_branch
        %566 = sbr.rel (%p564) target = $region60
      $region59: #{tpu_custom_call.1} parent=5 // pred_region
        %s567 = ssub.s32 %s18, 2
        // Predicated region
        $region61: #{tpu_custom_call.1} parent=59 // pred_check
          %p568 = pneg %p181
        $region62: #{tpu_custom_call.1} parent=59 // pred_check_branch
          %570 = sbr.rel (%p568) target = $region64
        $region63: #{tpu_custom_call.1} parent=59 // pred_region
          %s571 = sand.u32 %s166, 1
          %s572 = scalar_lea.sflag [#allocation5], %s571
          %s573 = sand.u32 %s166, 1
          %s574 = smul.addr %s573, 24
          %s575 = scalar_lea.vmem [#allocation8], %s574
          %576 = dma.done %s572, 384
        $region64: #{tpu_custom_call.1} parent=59 // pred_fallthru
          _
      $region60: #{tpu_custom_call.1} parent=5 // pred_fallthru
        _
    $region6: #{tpu_custom_call.1} parent=1 // loop_footer
      %s22 = sadd.s32 1, %s18
    $region7: #{tpu_custom_call.1} parent=1 // loop_footer_branch
      %17 = sbr.rel target = $region3
    $region8: #{tpu_custom_call.1} parent=1 // loop_exit
      _
    %577 = vsyncpa [#allocation4], 1
    %s578 = scalar_lea.sflag [#allocation4], 1
    %579 = vsyncpa %s578, 1
    %580 = vsyncpa [#allocation7], 1
    %581 = vsyncpa [#allocation5], 1
    %s582 = scalar_lea.sflag [#allocation5], 1
    %583 = vsyncpa %s582, 1

</llo_original>
